<compile_context>
chip_gen: v7x
topology: tpu7x:2x2x1
jax: 0.10.0
libtpu: 0.0.40
codegen_flags: <defaults>
</compile_context>

<pallas_src>
import math
from functools import partial

import jax
import jax.numpy as jnp
from jax.experimental import pallas as pl
from jax.experimental.pallas import tpu as pltpu


VMEM_LIMIT = 32 * 1024 * 1024   # safe scoped-VMEM budget on v5e/v6e/v7x


# ----------------------- small helpers -----------------------

def _round_up(a, b):
    return ((a + b - 1) // b) * b


def _row_tile(m, target=512):
    """Row tile for matmuls: up to `target`, multiple of 8."""
    return min(target, _round_up(m, 8))


def _div_tile(n, target=512):
    """Largest multiple-of-8 divisor of n that is <= target (falls back to n)."""
    if n <= target:
        return n
    best = 1
    for t in range(8, target + 1, 8):
        if n % t == 0:
            best = t
    return best if best > 1 else n


def _attn_q_tile(n_head, n_keys, budget_bytes=4 * 1024 * 1024):
    """Query tile so the f32 [n_head, tq, N] score block stays within budget."""
    tq = budget_bytes // max(1, n_head * n_keys * 4)
    tq = max(8, min(256, (tq // 8) * 8))
    return min(tq, _round_up(n_keys, 8))


# ----------------------- Pallas kernels -----------------------

def _linear_bias_kernel(x_ref, w_ref, bias_ref, o_ref):
    # y = x @ W_folded + bias_folded      (BN eval affine pre-folded into W / bias)
    z = jnp.dot(x_ref[...], w_ref[...], preferred_element_type=jnp.float32)
    o_ref[...] = (z + bias_ref[...]).astype(o_ref.dtype)


def linear_bias(x2d, w, bias):
    """x2d: [M, Cin] -> [M, Cout] (bf16).  W/bias already have BN folded in."""
    M, Cin = x2d.shape
    Cout = w.shape[1]
    tm = _row_tile(M)
    M_pad = _round_up(M, tm)
    xb = x2d.astype(jnp.bfloat16)
    if M_pad != M:
        xb = jnp.pad(xb, ((0, M_pad - M), (0, 0)))
    out = pl.pallas_call(
        _linear_bias_kernel,
        out_shape=jax.ShapeDtypeStruct((M_pad, Cout), jnp.bfloat16),
        grid_spec=pltpu.PrefetchScalarGridSpec(
            num_scalar_prefetch=0,
            grid=(M_pad // tm,),
            in_specs=[
                pl.BlockSpec((tm, Cin), lambda i: (i, 0)),
                pl.BlockSpec((Cin, Cout), lambda i: (0, 0)),
                pl.BlockSpec((1, Cout), lambda i: (0, 0)),
            ],
            out_specs=pl.BlockSpec((tm, Cout), lambda i: (i, 0)),
        ),
        compiler_params=pltpu.CompilerParams(
            dimension_semantics=("parallel",),
            vmem_limit_bytes=VMEM_LIMIT),
    )(xb, w.astype(jnp.bfloat16), bias.reshape(1, Cout).astype(jnp.float32))
    return out[:M] if M_pad != M else out


def _qkv_kernel(x_ref, wqk_ref, wv_ref, bqk_ref, bv_ref, pqk_ref, pv_ref,
                qk_ref, v_ref):
    # fused Q|K and V projections (BN eval affine folded into W/bias for q, k):
    #   qk = x @ W_qk + b_qk + pos_qk     (pos pre-scaled by the BN affine)
    #   v  = x @ W_v  + b_v  + pos
    x = x_ref[0]
    zqk = jnp.dot(x, wqk_ref[...], preferred_element_type=jnp.float32)
    qk_ref[0] = (zqk + bqk_ref[...] + pqk_ref[...]).astype(qk_ref.dtype)
    zv = jnp.dot(x, wv_ref[...], preferred_element_type=jnp.float32)
    v_ref[0] = (zv + bv_ref[...] + pv_ref[...]).astype(v_ref.dtype)


def qkv_projection(x_bts, w_qk, b_qk, pos_qk, w_v, b_v, pos_v):
    """x_bts: [B, L, Cin]; pos_qk: [L, 2*dh]; pos_v: [L, dh]  (reused across B).
    Returns (qk_pre [B, L, 2*dh] bf16, v_pre [B, L, dh] bf16)."""
    B, L, Cin = x_bts.shape
    C_qk = w_qk.shape[1]
    C_v = w_v.shape[1]
    tl = _row_tile(L)
    L_pad = _round_up(L, tl)
    xb = x_bts.astype(jnp.bfloat16)
    pqk = pos_qk.astype(jnp.float32)
    pv = pos_v.astype(jnp.float32)
    if L_pad != L:
        xb = jnp.pad(xb, ((0, 0), (0, L_pad - L), (0, 0)))
        pqk = jnp.pad(pqk, ((0, L_pad - L), (0, 0)))
        pv = jnp.pad(pv, ((0, L_pad - L), (0, 0)))
    qk, v = pl.pallas_call(
        _qkv_kernel,
        out_shape=(jax.ShapeDtypeStruct((B, L_pad, C_qk), jnp.bfloat16),
                   jax.ShapeDtypeStruct((B, L_pad, C_v), jnp.bfloat16)),
        grid_spec=pltpu.PrefetchScalarGridSpec(
            num_scalar_prefetch=0,
            # B innermost: weights / bias / pos slabs keep the same block index across
            # the inner loop, so they are DMA'd only once per L-tile (no [B*L, C]
            # broadcast of pos ever materialized in HBM).
            grid=(L_pad // tl, B),
            in_specs=[
                pl.BlockSpec((1, tl, Cin), lambda i, b: (b, i, 0)),
                pl.BlockSpec((Cin, C_qk), lambda i, b: (0, 0)),
                pl.BlockSpec((Cin, C_v), lambda i, b: (0, 0)),
                pl.BlockSpec((1, C_qk), lambda i, b: (0, 0)),
                pl.BlockSpec((1, C_v), lambda i, b: (0, 0)),
                pl.BlockSpec((tl, C_qk), lambda i, b: (i, 0)),
                pl.BlockSpec((tl, C_v), lambda i, b: (i, 0)),
            ],
            out_specs=[pl.BlockSpec((1, tl, C_qk), lambda i, b: (b, i, 0)),
                       pl.BlockSpec((1, tl, C_v), lambda i, b: (b, i, 0))],
        ),
        compiler_params=pltpu.CompilerParams(
            dimension_semantics=("parallel", "parallel"),
            vmem_limit_bytes=VMEM_LIMIT),
    )(xb, w_qk.astype(jnp.bfloat16), w_v.astype(jnp.bfloat16),
      b_qk.reshape(1, C_qk).astype(jnp.float32),
      b_v.reshape(1, C_v).astype(jnp.float32), pqk, pv)
    if L_pad != L:
        qk = qk[:, :L]
        v = v[:, :L]
    return qk, v


def _plif_step(x, v_ref, decay, v_th):
    # ParametricLIF, decay_input=True, v_reset=None (soft reset), Heaviside forward.
    v = v_ref[...] + (x - v_ref[...]) * decay                  # charge
    spike = (v >= v_th).astype(jnp.float32)                    # fire
    v_ref[...] = v - spike * v_th                              # soft reset
    return spike


def _plif_kernel(x_ref, o_ref, v_ref, *, decay, v_th):
    @pl.when(pl.program_id(2) == 0)
    def _():
        v_ref[...] = jnp.zeros_like(v_ref)
    spike = _plif_step(x_ref[0, 0].astype(jnp.float32), v_ref, decay, v_th)
    o_ref[0, 0] = spike.astype(o_ref.dtype)


def _plif_affine_kernel(x_ref, scale_ref, shift_ref, o_ref, v_ref, *, decay, v_th):
    @pl.when(pl.program_id(2) == 0)
    def _():
        v_ref[...] = jnp.zeros_like(v_ref)
    x = x_ref[0, 0].astype(jnp.float32) * scale_ref[...] + shift_ref[...]
    spike = _plif_step(x, v_ref, decay, v_th)
    o_ref[0, 0] = spike.astype(o_ref.dtype)


def _plif_sew_kernel(x_ref, res_ref, o_ref, v_ref, *, decay, v_th, cnf):
    # PLIF scan fused with the SEW residual combine: out = sew(spike, residual).
    @pl.when(pl.program_id(2) == 0)
    def _():
        v_ref[...] = jnp.zeros_like(v_ref)
    spike = _plif_step(x_ref[0, 0].astype(jnp.float32), v_ref, decay, v_th)
    res = res_ref[0, 0].astype(jnp.float32)
    if cnf == 'ADD':
        y = spike + res
    elif cnf == 'AND':
        y = spike * res
    elif cnf == 'IAND':
        y = spike * (1.0 - res)
    else:
        raise NotImplementedError(cnf)
    o_ref[0, 0] = y.astype(o_ref.dtype)


def _plif_common(B, T, S, C):
    ts = _div_tile(S)
    grid = (B, S // ts, T)
    spec = pl.BlockSpec((1, 1, ts, C), lambda b, s, t: (b, t, s, 0))
    cp = pltpu.CompilerParams(
        dimension_semantics=("parallel", "parallel", "arbitrary"),
        vmem_limit_bytes=VMEM_LIMIT)
    scratch = [pltpu.VMEM((ts, C), jnp.float32)]
    return grid, spec, cp, scratch


def plif(x, scale=None, shift=None, decay=0.5, v_th=1.0):
    """x: [B, T, S, C] -> binary spikes (bf16).  Grid (B, S-tiles, T):
    parallel, parallel, arbitrary(T-scan).  Membrane potential in VMEM scratch."""
    B, T, S, C = x.shape
    grid, spec, cp, scratch = _plif_common(B, T, S, C)
    out_shape = jax.ShapeDtypeStruct((B, T, S, C), jnp.bfloat16)

    if scale is None:
        return pl.pallas_call(
            partial(_plif_kernel, decay=decay, v_th=v_th),
            out_shape=out_shape,
            grid_spec=pltpu.PrefetchScalarGridSpec(
                num_scalar_prefetch=0, grid=grid,
                in_specs=[spec], out_specs=spec,
                scratch_shapes=scratch),
            compiler_params=cp,
        )(x)

    aff_spec = pl.BlockSpec((1, C), lambda b, s, t: (0, 0))
    return pl.pallas_call(
        partial(_plif_affine_kernel, decay=decay, v_th=v_th),
        out_shape=out_shape,
        grid_spec=pltpu.PrefetchScalarGridSpec(
            num_scalar_prefetch=0, grid=grid,
            in_specs=[spec, aff_spec, aff_spec], out_specs=spec,
            scratch_shapes=scratch),
        compiler_params=cp,
    )(x, scale.reshape(1, C).astype(jnp.float32),
      shift.reshape(1, C).astype(jnp.float32))


def plif_sew(x, residual, cnf='ADD', decay=0.5, v_th=1.0):
    """sew_function(PLIF(x), residual) fused in one pass.  x, residual: [B,T,S,C].
    Output is f32 (residual path carries real-valued activations)."""
    B, T, S, C = x.shape
    grid, spec, cp, scratch = _plif_common(B, T, S, C)
    return pl.pallas_call(
        partial(_plif_sew_kernel, decay=decay, v_th=v_th, cnf=cnf),
        out_shape=jax.ShapeDtypeStruct((B, T, S, C), jnp.float32),
        grid_spec=pltpu.PrefetchScalarGridSpec(
            num_scalar_prefetch=0, grid=grid,
            in_specs=[spec, spec], out_specs=spec,
            scratch_shapes=scratch),
        compiler_params=cp,
    )(x, residual)


def _hamming_attn_kernel(q_ref, k_ref, v_ref, o_ref, s_ref, *, inv_d):
    # q, k are binary spikes (bf16 0/1) -> 2q-1 / 2k-1 are exact +-1 in bf16.
    q = 2.0 * q_ref[0] - 1.0                      # [H, tq, d]
    k = 2.0 * k_ref[0] - 1.0                      # [H, N,  d]
    logits = jnp.einsum('hqd,hkd->hqk', q, k, preferred_element_type=jnp.float32)
    score = 0.5 + (0.5 * inv_d) * logits          # bounded in [0, 1] -> no max-sub needed
    e = jnp.exp(score)
    p = e * pl.reciprocal(jnp.sum(e, axis=-1, keepdims=True), approx=True)
    o = jnp.einsum('hqk,hkd->hqd', p.astype(v_ref.dtype), v_ref[0],
                   preferred_element_type=jnp.float32)
    o_ref[0] = o.astype(o_ref.dtype)
    s_ref[0] = p.astype(s_ref.dtype)


def hamming_attention(q, k, v, score_dtype=jnp.bfloat16):
    """q, k, v: [B, n_head, N, d] -> (out [B, nh, N, d] bf16, score [B, nh, N, N]).
    Heads are packed per grid step; queries are tiled so VMEM stays O(tq*N + N*d)."""
    B, Hh, N, d = q.shape
    tq = _attn_q_tile(Hh, N)
    Nq_pad = _round_up(N, tq)
    qb = q.astype(jnp.bfloat16)
    kb = k.astype(jnp.bfloat16)
    vb = v.astype(jnp.bfloat16)
    if Nq_pad != N:
        qb = jnp.pad(qb, ((0, 0), (0, 0), (0, Nq_pad - N), (0, 0)))
    o, s = pl.pallas_call(
        partial(_hamming_attn_kernel, inv_d=1.0 / d),
        out_shape=(jax.ShapeDtypeStruct((B, Hh, Nq_pad, d), jnp.bfloat16),
                   jax.ShapeDtypeStruct((B, Hh, Nq_pad, N), score_dtype)),
        grid_spec=pltpu.PrefetchScalarGridSpec(
            num_scalar_prefetch=0,
            grid=(B, Nq_pad // tq),
            in_specs=[pl.BlockSpec((1, Hh, tq, d), lambda b, i: (b, 0, i, 0)),
                      pl.BlockSpec((1, Hh, N, d), lambda b, i: (b, 0, 0, 0)),
                      pl.BlockSpec((1, Hh, N, d), lambda b, i: (b, 0, 0, 0))],
            out_specs=[pl.BlockSpec((1, Hh, tq, d), lambda b, i: (b, 0, i, 0)),
                       pl.BlockSpec((1, Hh, tq, N), lambda b, i: (b, 0, i, 0))],
        ),
        compiler_params=pltpu.CompilerParams(
            dimension_semantics=("parallel", "parallel"),
            vmem_limit_bytes=VMEM_LIMIT),
    )(qb, kb, vb)
    if Nq_pad != N:
        o = o[:, :, :N]
        s = s[:, :, :N]
    return o, s


# ----------------------- plain-JAX glue -----------------------

def position_embedding_sine(T, H, W, C, scale=2.0 * math.pi):
    x_embed = jnp.broadcast_to(jnp.arange(W, dtype=jnp.float32)[None, None, :], (T, H, W))
    y_embed = jnp.broadcast_to(jnp.arange(H, dtype=jnp.float32)[None, :, None], (T, H, W))
    x_embed = x_embed / x_embed[:, :, -1:] * scale
    y_embed = y_embed / y_embed[:, -1:, :] * scale
    dim_t = jnp.arange(0, C, 2, dtype=jnp.float32)
    dim_t = 10000.0 ** (dim_t / C)
    pos_x = x_embed[..., None] / dim_t
    pos_y = y_embed[..., None] / dim_t
    pos_x = jnp.concatenate([jnp.sin(pos_x[..., 0::2]), jnp.cos(pos_x[..., 1::2])], axis=-1)
    pos_y = jnp.concatenate([jnp.sin(pos_y[..., 0::2]), jnp.cos(pos_y[..., 1::2])], axis=-1)
    pos = jnp.concatenate([pos_y, pos_x], axis=-1)[:, None]     # [T, 1, H, W, C]
    return pos / T


def init_params(key, d_model, d_hidden):
    ks = jax.random.split(key, 8)
    eps = 1e-5
    inv = 1.0 / math.sqrt(1.0 + eps)      # BN eval affine: gamma / sqrt(var + eps)

    def kaiming(k, cin, cout):
        # kaiming_normal_(mode='fan_out', nonlinearity='relu') on a [out, in] weight
        return jax.random.normal(k, (cin, cout), jnp.float32) * math.sqrt(2.0 / cout)

    def torch_bias(k, fan_in, size):
        bound = 1.0 / math.sqrt(fan_in)
        return jax.random.uniform(k, (size,), jnp.float32, minval=-bound, maxval=bound)

    ffn_hidden = d_hidden
    return {
        'w_q': kaiming(ks[0], d_model, d_hidden),
        'w_k': kaiming(ks[1], d_model, d_hidden),
        'w_v': kaiming(ks[2], d_model, d_hidden),
        'b_v': torch_bias(ks[3], d_model, d_hidden),
        'w_out': kaiming(ks[4], d_hidden, d_model),
        'b_out': torch_bias(ks[5], d_hidden, d_model),
        'bn_q_scale': jnp.full((d_hidden,), inv, jnp.float32),
        'bn_q_shift': jnp.zeros((d_hidden,), jnp.float32),
        'bn_k_scale': jnp.full((d_hidden,), inv, jnp.float32),
        'bn_k_shift': jnp.zeros((d_hidden,), jnp.float32),
        'bn_v_scale': jnp.full((d_hidden,), inv, jnp.float32),
        'bn_v_shift': jnp.zeros((d_hidden,), jnp.float32),
        'bn_out_scale': jnp.zeros((d_model,), jnp.float32),     # bn_out.weight init to 0
        'bn_out_shift': jnp.zeros((d_model,), jnp.float32),
        'w_ffn1': kaiming(ks[6], d_model, ffn_hidden),
        'bn1_scale': jnp.zeros((ffn_hidden,), jnp.float32),     # bn1.weight init to 0
        'bn1_shift': jnp.zeros((ffn_hidden,), jnp.float32),
        'w_red': kaiming(ks[7], ffn_hidden, ffn_hidden // 2),
        'bn_red_scale': jnp.full((ffn_hidden // 2,), inv, jnp.float32),
        'bn_red_shift': jnp.zeros((ffn_hidden // 2,), jnp.float32),
    }


def transformer_encoder_layer(params, x, n_head, cnf='ADD'):
    T, B, H, W, d_model = x.shape
    d_hidden = params['w_q'].shape[1]
    c_v = d_hidden // n_head
    S = H * W
    N = T * S
    M = B * N

    # [T,B,H,W,C] -> [B,T,S,C] (batch-outer layout used by every kernel below)
    x_bts = jnp.transpose(x, (1, 0, 2, 3, 4)).reshape(B, T, S, d_model)

    # positional encoding slab, identical for every batch element: [T*S, d_hidden]
    pos2d = position_embedding_sine(T, H, W, d_hidden).reshape(T * S, d_hidden)

    # --- fused Q|K and V projections with BN(eval) folded into weights/bias ---
    s_q, b_q = params['bn_q_scale'], params['bn_q_shift']
    s_k, b_k = params['bn_k_scale'], params['bn_k_shift']
    w_qk = jnp.concatenate([params['w_q'] * s_q[None, :],
                            params['w_k'] * s_k[None, :]], axis=1)
    b_qk = jnp.concatenate([b_q, b_k], axis=0)
    pos_qk = jnp.concatenate([pos2d * s_q[None, :], pos2d * s_k[None, :]], axis=1)

    qk_pre, v_pre = qkv_projection(x_bts.reshape(B, N, d_model),
                                   w_qk, b_qk, pos_qk,
                                   params['w_v'], params['b_v'], pos2d)
    qk_pre = qk_pre.reshape(B, T, S, 2 * d_hidden)
    v_pre = v_pre.reshape(B, T, S, d_hidden)

    # single PLIF scan over the concatenated q|k slab (one launch, one HBM pass)
    qk_s = plif(qk_pre)
    q_s = qk_s[..., :d_hidden]
    k_s = qk_s[..., d_hidden:]

    def split_heads(t):                        # [B,T,S,dh] -> [B, nh, N, c_v]
        t = t.reshape(B, T, S, n_head, c_v)
        return jnp.transpose(t, (0, 3, 1, 2, 4)).reshape(B, n_head, N, c_v)

    attn_o, score = hamming_attention(split_heads(q_s), split_heads(k_s),
                                      split_heads(v_pre))

    # concat heads back to [B, T, S, d_hidden]
    attn_cat = jnp.transpose(attn_o.reshape(B, n_head, T, S, c_v),
                             (0, 2, 3, 1, 4)).reshape(B, T, S, d_hidden)

    # bn_v + sn_v fused (affine inside the PLIF kernel)
    v_s = plif(attn_cat, scale=params['bn_v_scale'], shift=params['bn_v_shift'])

    # linear_out + bn_out folded; sn_out + SEW residual fused in one PLIF pass
    w_out_f = params['w_out'] * params['bn_out_scale'][None, :]
    b_out_f = params['b_out'] * params['bn_out_scale'] + params['bn_out_shift']
    out_pre = linear_bias(v_s.reshape(M, d_hidden), w_out_f, b_out_f)
    x1 = plif_sew(out_pre.reshape(B, T, S, d_model), x_bts, cnf=cnf)   # f32

    # --- feed-forward net ---
    # TODO(synk): layer.Dropout treated as identity (inference mode, p inactive).
    w1_f = params['w_ffn1'] * params['bn1_scale'][None, :]
    h1 = linear_bias(x1.reshape(M, d_model), w1_f, params['bn1_shift'])
    ffn_hidden = w1_f.shape[1]
    h1_s = plif(h1.reshape(B, T, S, ffn_hidden))

    wr_f = params['w_red'] * params['bn_red_scale'][None, :]
    c_red = wr_f.shape[1]
    h2 = linear_bias(h1_s.reshape(M, ffn_hidden), wr_f, params['bn_red_shift'])
    # sn_reduce + SEW residual fused (requires d_hidden // 2 == d_model, as in torch)
    x_out = plif_sew(h2.reshape(B, T, S, c_red), x1, cnf=cnf)

    out = jnp.transpose(x_out.reshape(B, T, H, W, d_model), (1, 0, 2, 3, 4))
    return out, score                            # score: [B, n_head, N, N] (bf16)


if __name__ == "__main__":
    T, B, H, W = 4, 2, 4, 4
    d_model, d_hidden, n_head = 32, 64, 4      # d_hidden // 2 == d_model for the residual ADD

    key = jax.random.PRNGKey(0)
    kx, kp = jax.random.split(key)
    x = jax.random.normal(kx, (T, B, H, W, d_model), jnp.float32)
    params = init_params(kp, d_model, d_hidden)

    out, score = transformer_encoder_layer(params, x, n_head, cnf='ADD')
    out, score = jax.block_until_ready((out, score))

    assert out.shape == (T, B, H, W, d_model)
    assert score.shape == (B, n_head, T * H * W, T * H * W)
    assert bool(jnp.all(jnp.isfinite(out))) and bool(jnp.all(jnp.isfinite(score)))
    print("KERNEL_OK")
</pallas_src>

<mosaic_0001>
module attributes {stable_mosaic.version = 11 : i64} {
  func.func @_qkv_kernel(%arg0: i32, %arg1: i32, %arg2: memref<1x64x32xbf16, #tpu.memory_space<vmem>>, %arg3: memref<32x128xbf16, #tpu.memory_space<vmem>>, %arg4: memref<32x64xbf16, #tpu.memory_space<vmem>>, %arg5: memref<1x128xf32, #tpu.memory_space<vmem>>, %arg6: memref<1x64xf32, #tpu.memory_space<vmem>>, %arg7: memref<64x128xf32, #tpu.memory_space<vmem>>, %arg8: memref<64x64xf32, #tpu.memory_space<vmem>>, %arg9: memref<1x64x128xbf16, #tpu.memory_space<vmem>>, %arg10: memref<1x64x64xbf16, #tpu.memory_space<vmem>>) attributes {dimension_semantics = [#tpu.dimension_semantics<parallel>, #tpu.dimension_semantics<parallel>], iteration_bounds = array<i64: 1, 2>, scalar_prefetch = 0 : i64, scratch_operands = 0 : i64, tpu.core_type = #tpu.core_type<tc>, window_params = [{transform_indices = @transform_0, window_bounds = array<i64: 1, 64, 32>}, {pipeline_mode = #tpu.pipeline_mode<synchronous>, transform_indices = @transform_1, window_bounds = array<i64: 32, 128>}, {pipeline_mode = #tpu.pipeline_mode<synchronous>, transform_indices = @transform_2, window_bounds = array<i64: 32, 64>}, {pipeline_mode = #tpu.pipeline_mode<synchronous>, transform_indices = @transform_3, window_bounds = array<i64: 1, 128>}, {pipeline_mode = #tpu.pipeline_mode<synchronous>, transform_indices = @transform_4, window_bounds = array<i64: 1, 64>}, {transform_indices = @transform_5, window_bounds = array<i64: 64, 128>}, {transform_indices = @transform_6, window_bounds = array<i64: 64, 64>}, {transform_indices = @transform_7, window_bounds = array<i64: 1, 64, 128>}, {transform_indices = @transform_8, window_bounds = array<i64: 1, 64, 64>}]} {
    %c0 = arith.constant 0 : index
    %c0_0 = arith.constant 0 : index
    %c0_1 = arith.constant 0 : index
    %0 = vector.load %arg2[%c0, %c0_0, %c0_1] : memref<1x64x32xbf16, #tpu.memory_space<vmem>>, vector<1x64x32xbf16>
    %1 = vector.shape_cast %0 : vector<1x64x32xbf16> to vector<64x32xbf16>
    %c0_2 = arith.constant 0 : index
    %c0_3 = arith.constant 0 : index
    %2 = vector.load %arg3[%c0_2, %c0_3] : memref<32x128xbf16, #tpu.memory_space<vmem>>, vector<32x128xbf16>
    %cst = arith.constant dense<0.000000e+00> : vector<64x128xf32>
    %3 = tpu.matmul %1, %2, %cst {dimension_numbers = #tpu.dot_dimension_numbers<[1], [0], [0], [1], [0, 0, 1, 1], [], []>} : vector<64x32xbf16>, vector<32x128xbf16>, vector<64x128xf32> -> vector<64x128xf32>
    %c0_4 = arith.constant 0 : index
    %c0_5 = arith.constant 0 : index
    %4 = vector.load %arg5[%c0_4, %c0_5] : memref<1x128xf32, #tpu.memory_space<vmem>>, vector<1x128xf32>
    %5 = vector.broadcast %4 : vector<1x128xf32> to vector<64x128xf32>
    %6 = arith.addf %3, %5 : vector<64x128xf32>
    %c0_6 = arith.constant 0 : index
    %c0_7 = arith.constant 0 : index
    %7 = vector.load %arg7[%c0_6, %c0_7] : memref<64x128xf32, #tpu.memory_space<vmem>>, vector<64x128xf32>
    %8 = arith.addf %6, %7 : vector<64x128xf32>
    %9 = arith.truncf %8 : vector<64x128xf32> to vector<64x128xbf16>
    %c0_8 = arith.constant 0 : index
    %c0_9 = arith.constant 0 : index
    %c0_10 = arith.constant 0 : index
    %10 = vector.load %arg9[%c0_8, %c0_9, %c0_10] : memref<1x64x128xbf16, #tpu.memory_space<vmem>>, vector<1x64x128xbf16>
    %11 = vector.shape_cast %10 : vector<1x64x128xbf16> to vector<64x128xbf16>
    %12 = vector.shape_cast %9 : vector<64x128xbf16> to vector<1x64x128xbf16>
    tpu.vector_store %arg9[%c0_8, %c0_9, %c0_10], %12 {strides = array<i32>} : memref<1x64x128xbf16, #tpu.memory_space<vmem>>, vector<1x64x128xbf16>,
    %c0_11 = arith.constant 0 : index
    %c0_12 = arith.constant 0 : index
    %13 = vector.load %arg4[%c0_11, %c0_12] : memref<32x64xbf16, #tpu.memory_space<vmem>>, vector<32x64xbf16>
    %cst_13 = arith.constant dense<0.000000e+00> : vector<64x64xf32>
    %14 = tpu.matmul %1, %13, %cst_13 {dimension_numbers = #tpu.dot_dimension_numbers<[1], [0], [0], [1], [0, 0, 1, 1], [], []>} : vector<64x32xbf16>, vector<32x64xbf16>, vector<64x64xf32> -> vector<64x64xf32>
    %c0_14 = arith.constant 0 : index
    %c0_15 = arith.constant 0 : index
    %15 = vector.load %arg6[%c0_14, %c0_15] : memref<1x64xf32, #tpu.memory_space<vmem>>, vector<1x64xf32>
    %16 = vector.broadcast %15 : vector<1x64xf32> to vector<64x64xf32>
    %17 = arith.addf %14, %16 : vector<64x64xf32>
    %c0_16 = arith.constant 0 : index
    %c0_17 = arith.constant 0 : index
    %18 = vector.load %arg8[%c0_16, %c0_17] : memref<64x64xf32, #tpu.memory_space<vmem>>, vector<64x64xf32>
    %19 = arith.addf %17, %18 : vector<64x64xf32>
    %20 = arith.truncf %19 : vector<64x64xf32> to vector<64x64xbf16>
    %c0_18 = arith.constant 0 : index
    %c0_19 = arith.constant 0 : index
    %c0_20 = arith.constant 0 : index
    %21 = vector.load %arg10[%c0_18, %c0_19, %c0_20] : memref<1x64x64xbf16, #tpu.memory_space<vmem>>, vector<1x64x64xbf16>
    %22 = vector.shape_cast %21 : vector<1x64x64xbf16> to vector<64x64xbf16>
    %23 = vector.shape_cast %20 : vector<64x64xbf16> to vector<1x64x64xbf16>
    tpu.vector_store %arg10[%c0_18, %c0_19, %c0_20], %23 {strides = array<i32>} : memref<1x64x64xbf16, #tpu.memory_space<vmem>>, vector<1x64x64xbf16>,
    return
  }
  func.func @transform_0(%arg0: i32, %arg1: i32) -> (i32, i32, i32) {
    %c0_i32 = arith.constant 0 : i32
    %c0_i32_0 = arith.constant 0 : i32
    return %arg1, %arg0, %c0_i32 : i32, i32, i32
  }
  func.func @transform_1(%arg0: i32, %arg1: i32) -> (i32, i32) {
    %c0_i32 = arith.constant 0 : i32
    %c0_i32_0 = arith.constant 0 : i32
    %c0_i32_1 = arith.constant 0 : i32
    return %c0_i32, %c0_i32_0 : i32, i32
  }
  func.func @transform_2(%arg0: i32, %arg1: i32) -> (i32, i32) {
    %c0_i32 = arith.constant 0 : i32
    %c0_i32_0 = arith.constant 0 : i32
    %c0_i32_1 = arith.constant 0 : i32
    return %c0_i32, %c0_i32_0 : i32, i32
  }
  func.func @transform_3(%arg0: i32, %arg1: i32) -> (i32, i32) {
    %c0_i32 = arith.constant 0 : i32
    %c0_i32_0 = arith.constant 0 : i32
    %c0_i32_1 = arith.constant 0 : i32
    return %c0_i32, %c0_i32_0 : i32, i32
  }
  func.func @transform_4(%arg0: i32, %arg1: i32) -> (i32, i32) {
    %c0_i32 = arith.constant 0 : i32
    %c0_i32_0 = arith.constant 0 : i32
    %c0_i32_1 = arith.constant 0 : i32
    return %c0_i32, %c0_i32_0 : i32, i32
  }
  func.func @transform_5(%arg0: i32, %arg1: i32) -> (i32, i32) {
    %c0_i32 = arith.constant 0 : i32
    %c0_i32_0 = arith.constant 0 : i32
    return %arg0, %c0_i32 : i32, i32
  }
  func.func @transform_6(%arg0: i32, %arg1: i32) -> (i32, i32) {
    %c0_i32 = arith.constant 0 : i32
    %c0_i32_0 = arith.constant 0 : i32
    return %arg0, %c0_i32 : i32, i32
  }
  func.func @transform_7(%arg0: i32, %arg1: i32) -> (i32, i32, i32) {
    %c0_i32 = arith.constant 0 : i32
    %c0_i32_0 = arith.constant 0 : i32
    return %arg1, %arg0, %c0_i32 : i32, i32, i32
  }
  func.func @transform_8(%arg0: i32, %arg1: i32) -> (i32, i32, i32) {
    %c0_i32 = arith.constant 0 : i32
    %c0_i32_0 = arith.constant 0 : i32
    return %arg1, %arg0, %c0_i32 : i32, i32, i32
  }
}

</mosaic_0001>

<llo_original>
// kernel: tpu_custom_call.1
$region0: #{tpu_custom_call.1}
  #allocation0 [shape = 'u32[]', space=smem, size = 0x4, offset = 0x4, fixed_abs, tag = 'smem constant byte address 0x4 - core index']
  #allocation1 [shape = 'u32[144,128]{1,0:T(1,128)}', space=vmem, size = 0x12000, scoped, tag = 'internal scratch']
  %s0 = inlined_call_operand.vmem [shape: bf16[2,64,32], index: 0, kind: input, shape index: {}]
  %s1 = inlined_call_operand.vmem [shape: bf16[32,128], index: 1, kind: input, shape index: {}]
  %s2 = inlined_call_operand.vmem [shape: bf16[32,64], index: 2, kind: input, shape index: {}]
  %s3 = inlined_call_operand.vmem [shape: f32[1,128], index: 3, kind: input, shape index: {}]
  %s4 = inlined_call_operand.vmem [shape: f32[1,64], index: 4, kind: input, shape index: {}]
  %s5 = inlined_call_operand.vmem [shape: f32[64,128], index: 5, kind: input, shape index: {}]
  %s6 = inlined_call_operand.hbm [shape: f32[64,64], index: 6, kind: input, shape index: {}]
  %s7 = inlined_call_operand.hbm [shape: bf16[2,64,128], index: 7, kind: output, shape index: {0}]
  %s8 = inlined_call_operand.hbm [shape: bf16[2,64,64], index: 8, kind: output, shape index: {1}]
  %9 = xla_tuple %s7, %s8
  %s10 = sld [smem:[#allocation0]]
  $region73: #{tpu_custom_call.1} parent=0
    _
  %s12 = ssub.s32 1, %s10
  %s13 = scalar_select 0, %s12, %s10
  $region1: #{tpu_custom_call.1} parent=0
    #allocation2 [shape = 'u8[32768]{0}', space=vmem, size = 0x8000, scoped, tag = 'input window, operand 6, single buffered']
    #allocation3 [shape = 's32[2]{0}', space=sflag, size = 0x8, scoped, tag = 'scoped memory for tpu_custom_call.1']
    #allocation4 [shape = 's32[2]{0}', space=sflag, size = 0x8, scoped, tag = 'scoped memory for tpu_custom_call.1']
    #allocation5 [shape = 'u8[32768]{0}', space=vmem, size = 0x8000, scoped, tag = 'output window, operand 0']
    #allocation6 [shape = 'u8[32768]{0}', space=vmem, size = 0x8000, scoped, tag = 'output window, operand 1']
    #allocation7 [shape = 's32[2]{0}', space=sflag, size = 0x8, scoped, tag = 'scoped memory for tpu_custom_call.1']
    %14 = vsyncpa [#allocation3], 0
    %15 = vsyncpa [#allocation4], 0
    %s16 = scalar_lea.sflag [#allocation4], 1
    %17 = vsyncpa %s16, 0
    %18 = vsyncpa [#allocation7], 0
    %s19 = scalar_lea.sflag [#allocation7], 1
    %20 = vsyncpa %s19, 0
    loop: start=0, step=1, limit=4
    $region2: #{tpu_custom_call.1} parent=1 // loop_pre_header
      _
    $region3: #{tpu_custom_call.1} parent=1 // loop_header
      %s22 = sphi 0, %s26
      %p23 = scmp.ge.s32.totalorder %s22, 4
      %s29 = sphi 0, %s41
      %s30 = sphi 0, %s37
      %s31 = sphi 0, %s29
      %s32 = sphi 0, %s30
      %s33 = sphi 0, %s31
      %s34 = sphi 0, %s32
      %s46 = sphi 0, %s48
      %s49 = sphi 0, %s46
      %s50 = sphi 0, %s49
      %s66 = sphi 0, %s50
      %s70 = sphi 0, %s70
      %s72 = sphi 0, %s70
      %s73 = sphi 0, %s72
      %s87 = sphi 0, %s73
      %s91 = sphi 0, %s91
      %s93 = sphi 0, %s91
      %s94 = sphi 0, %s93
      %s108 = sphi 0, %s94
      %s112 = sphi 0, %s112
      %s114 = sphi 0, %s112
      %s115 = sphi 0, %s114
      %s129 = sphi 0, %s115
      %s133 = sphi 0, %s133
      %s135 = sphi 0, %s133
      %s136 = sphi 0, %s135
      %s150 = sphi 0, %s136
      %s156 = sphi 0, %s158
      %s159 = sphi 0, %s156
      %s160 = sphi 0, %s159
      %s176 = sphi 0, %s160
      %s182 = sphi 0, %s184
      %s185 = sphi 0, %s182
      %s186 = sphi 0, %s185
      %s202 = sphi 0, %s186
      %s210 = sphi 0, %s212
      %s213 = sphi 0, %s210
      %s214 = sphi 0, %s213
      %s230 = sphi 0, %s214
      %s238 = sphi 0, %s240
      %s241 = sphi 0, %s238
      %s242 = sphi 0, %s241
      %s258 = sphi 0, %s242
    $region4: #{tpu_custom_call.1} parent=1 // loop_header_branch
      %25 = sbr.rel (%p23) target = $region8
    $region5: #{tpu_custom_call.1} parent=1 // loop_body
      %s27 = ssub.s32 %s22, 1
      %s28 = ssub.s32 %s22, 2
      %s35 = sadd.s32 1, %s30
      %p36 = scmp.ge.s32.totalorder %s35, 2
      %s37 = scalar_select %p36, 0, %s35
      %s38 = sadd.s32 1, %s29
      %s39 = scalar_select %p36, %s38, %s29
      %p40 = scmp.ge.s32.totalorder %s39, 1
      %s41 = scalar_select %p40, 0, %s39
      %s42 = ssub.s32 %s30, %s37
      %s43 = ssub.s32 %s29, %s41
      %s44 = sor.u32 %s42, %s43
      %p45 = scmp.eq.s32.totalorder %s44, 0
      %s47 = sadd.s32 %s46, 1
      %s48 = scalar_select %p45, %s46, %s47
      %p51 = pneg %p45
      %p52 = scmp.eq.s32.totalorder %s22, 1
      %p53 = por %p51, %p52
      %p54 = scmp.ne.s32.totalorder %s46, %s49
      %p55 = scmp.eq.s32.totalorder %s22, 0
      %p56 = por %p54, %p55
      %p57 = scmp.ne.s32.totalorder %s46, %s49
      %p58 = scmp.eq.s32.totalorder %s27, 1
      %p59 = por %p57, %p58
      %p60 = scmp.ne.s32.totalorder %s49, %s50
      %p61 = scmp.eq.s32.totalorder %s27, 0
      %p62 = por %p60, %p61
      %p63 = scmp.ne.s32.totalorder %s49, %s50
      %p64 = scmp.eq.s32.totalorder %s28, 1
      %p65 = por %p63, %p64
      %p67 = scmp.ne.s32.totalorder %s50, %s66
      %p68 = scmp.eq.s32.totalorder %s28, 0
      %p69 = por %p67, %p68
      %s71 = sadd.s32 %s70, 1
      %p74 = scmp.eq.s32.totalorder %s22, 1
      %p75 = scmp.ne.s32.totalorder %s70, %s72
      %p76 = scmp.eq.s32.totalorder %s22, 0
      %p77 = por %p75, %p76
      %p78 = scmp.ne.s32.totalorder %s70, %s72
      %p79 = scmp.eq.s32.totalorder %s27, 1
      %p80 = por %p78, %p79
      %p81 = scmp.ne.s32.totalorder %s72, %s73
      %p82 = scmp.eq.s32.totalorder %s27, 0
      %p83 = por %p81, %p82
      %p84 = scmp.ne.s32.totalorder %s72, %s73
      %p85 = scmp.eq.s32.totalorder %s28, 1
      %p86 = por %p84, %p85
      %p88 = scmp.ne.s32.totalorder %s73, %s87
      %p89 = scmp.eq.s32.totalorder %s28, 0
      %p90 = por %p88, %p89
      %s92 = sadd.s32 %s91, 1
      %p95 = scmp.eq.s32.totalorder %s22, 1
      %p96 = scmp.ne.s32.totalorder %s91, %s93
      %p97 = scmp.eq.s32.totalorder %s22, 0
      %p98 = por %p96, %p97
      %p99 = scmp.ne.s32.totalorder %s91, %s93
      %p100 = scmp.eq.s32.totalorder %s27, 1
      %p101 = por %p99, %p100
      %p102 = scmp.ne.s32.totalorder %s93, %s94
      %p103 = scmp.eq.s32.totalorder %s27, 0
      %p104 = por %p102, %p103
      %p105 = scmp.ne.s32.totalorder %s93, %s94
      %p106 = scmp.eq.s32.totalorder %s28, 1
      %p107 = por %p105, %p106
      %p109 = scmp.ne.s32.totalorder %s94, %s108
      %p110 = scmp.eq.s32.totalorder %s28, 0
      %p111 = por %p109, %p110
      %s113 = sadd.s32 %s112, 1
      %p116 = scmp.eq.s32.totalorder %s22, 1
      %p117 = scmp.ne.s32.totalorder %s112, %s114
      %p118 = scmp.eq.s32.totalorder %s22, 0
      %p119 = por %p117, %p118
      %p120 = scmp.ne.s32.totalorder %s112, %s114
      %p121 = scmp.eq.s32.totalorder %s27, 1
      %p122 = por %p120, %p121
      %p123 = scmp.ne.s32.totalorder %s114, %s115
      %p124 = scmp.eq.s32.totalorder %s27, 0
      %p125 = por %p123, %p124
      %p126 = scmp.ne.s32.totalorder %s114, %s115
      %p127 = scmp.eq.s32.totalorder %s28, 1
      %p128 = por %p126, %p127
      %p130 = scmp.ne.s32.totalorder %s115, %s129
      %p131 = scmp.eq.s32.totalorder %s28, 0
      %p132 = por %p130, %p131
      %s134 = sadd.s32 %s133, 1
      %p137 = scmp.eq.s32.totalorder %s22, 1
      %p138 = scmp.ne.s32.totalorder %s133, %s135
      %p139 = scmp.eq.s32.totalorder %s22, 0
      %p140 = por %p138, %p139
      %p141 = scmp.ne.s32.totalorder %s133, %s135
      %p142 = scmp.eq.s32.totalorder %s27, 1
      %p143 = por %p141, %p142
      %p144 = scmp.ne.s32.totalorder %s135, %s136
      %p145 = scmp.eq.s32.totalorder %s27, 0
      %p146 = por %p144, %p145
      %p147 = scmp.ne.s32.totalorder %s135, %s136
      %p148 = scmp.eq.s32.totalorder %s28, 1
      %p149 = por %p147, %p148
      %p151 = scmp.ne.s32.totalorder %s136, %s150
      %p152 = scmp.eq.s32.totalorder %s28, 0
      %p153 = por %p151, %p152
      %s154 = ssub.s32 %s29, %s41
      %p155 = scmp.eq.s32.totalorder %s154, 0
      %s157 = sadd.s32 %s156, 1
      %s158 = scalar_select %p155, %s156, %s157
      %p161 = pneg %p155
      %p162 = scmp.eq.s32.totalorder %s22, 1
      %p163 = por %p161, %p162
      %p164 = scmp.ne.s32.totalorder %s156, %s159
      %p165 = scmp.eq.s32.totalorder %s22, 0
      %p166 = por %p164, %p165
      %p167 = scmp.ne.s32.totalorder %s156, %s159
      %p168 = scmp.eq.s32.totalorder %s27, 1
      %p169 = por %p167, %p168
      %p170 = scmp.ne.s32.totalorder %s159, %s160
      %p171 = scmp.eq.s32.totalorder %s27, 0
      %p172 = por %p170, %p171
      %p173 = scmp.ne.s32.totalorder %s159, %s160
      %p174 = scmp.eq.s32.totalorder %s28, 1
      %p175 = por %p173, %p174
      %p177 = scmp.ne.s32.totalorder %s160, %s176
      %p178 = scmp.eq.s32.totalorder %s28, 0
      %p179 = por %p177, %p178
      %s180 = ssub.s32 %s29, %s41
      %p181 = scmp.eq.s32.totalorder %s180, 0
      %s183 = sadd.s32 %s182, 1
      %s184 = scalar_select %p181, %s182, %s183
      %p187 = pneg %p181
      %p188 = scmp.eq.s32.totalorder %s22, 1
      %p189 = por %p187, %p188
      %p190 = scmp.ne.s32.totalorder %s182, %s185
      %p191 = scmp.eq.s32.totalorder %s22, 0
      %p192 = por %p190, %p191
      %p193 = scmp.ne.s32.totalorder %s182, %s185
      %p194 = scmp.eq.s32.totalorder %s27, 1
      %p195 = por %p193, %p194
      %p196 = scmp.ne.s32.totalorder %s185, %s186
      %p197 = scmp.eq.s32.totalorder %s27, 0
      %p198 = por %p196, %p197
      %p199 = scmp.ne.s32.totalorder %s185, %s186
      %p200 = scmp.eq.s32.totalorder %s28, 1
      %p201 = por %p199, %p200
      %p203 = scmp.ne.s32.totalorder %s186, %s202
      %p204 = scmp.eq.s32.totalorder %s28, 0
      %p205 = por %p203, %p204
      %s206 = ssub.s32 %s30, %s37
      %s207 = ssub.s32 %s29, %s41
      %s208 = sor.u32 %s206, %s207
      %p209 = scmp.eq.s32.totalorder %s208, 0
      %s211 = sadd.s32 %s210, 1
      %s212 = scalar_select %p209, %s210, %s211
      %p215 = pneg %p209
      %p216 = scmp.eq.s32.totalorder %s22, 1
      %p217 = por %p215, %p216
      %p218 = scmp.ne.s32.totalorder %s210, %s213
      %p219 = scmp.eq.s32.totalorder %s22, 0
      %p220 = por %p218, %p219
      %p221 = scmp.ne.s32.totalorder %s210, %s213
      %p222 = scmp.eq.s32.totalorder %s27, 1
      %p223 = por %p221, %p222
      %p224 = scmp.ne.s32.totalorder %s213, %s214
      %p225 = scmp.eq.s32.totalorder %s27, 0
      %p226 = por %p224, %p225
      %p227 = scmp.ne.s32.totalorder %s213, %s214
      %p228 = scmp.eq.s32.totalorder %s28, 1
      %p229 = por %p227, %p228
      %p231 = scmp.ne.s32.totalorder %s214, %s230
      %p232 = scmp.eq.s32.totalorder %s28, 0
      %p233 = por %p231, %p232
      %s234 = ssub.s32 %s30, %s37
      %s235 = ssub.s32 %s29, %s41
      %s236 = sor.u32 %s234, %s235
      %p237 = scmp.eq.s32.totalorder %s236, 0
      %s239 = sadd.s32 %s238, 1
      %s240 = scalar_select %p237, %s238, %s239
      %p243 = pneg %p237
      %p244 = scmp.eq.s32.totalorder %s22, 1
      %p245 = por %p243, %p244
      %p246 = scmp.ne.s32.totalorder %s238, %s241
      %p247 = scmp.eq.s32.totalorder %s22, 0
      %p248 = por %p246, %p247
      %p249 = scmp.ne.s32.totalorder %s238, %s241
      %p250 = scmp.eq.s32.totalorder %s27, 1
      %p251 = por %p249, %p250
      %p252 = scmp.ne.s32.totalorder %s241, %s242
      %p253 = scmp.eq.s32.totalorder %s27, 0
      %p254 = por %p252, %p253
      %p255 = scmp.ne.s32.totalorder %s241, %s242
      %p256 = scmp.eq.s32.totalorder %s28, 1
      %p257 = por %p255, %p256
      %p259 = scmp.ne.s32.totalorder %s242, %s258
      %p260 = scmp.eq.s32.totalorder %s28, 0
      %p261 = por %p259, %p260
      %p262 = scmp.le.s32.totalorder 1, %s22
      %p263 = scmp.lt.s32.totalorder %s22, 3
      %p264 = pnand %p262, %p263
      %p265 = pneg %p264
      // Predicated region
      $region9: #{tpu_custom_call.1} parent=5 // pred_check
        _
      $region10: #{tpu_custom_call.1} parent=5 // pred_check_branch
        %267 = sbr.rel (%p264) target = $region12
      $region11: #{tpu_custom_call.1} parent=5 // pred_region
        %s268 = ssub.s32 %s22, 1
        // Predicated region
        $region13: #{tpu_custom_call.1} parent=11 // pred_check
          %p269 = pneg %p83
        $region14: #{tpu_custom_call.1} parent=11 // pred_check_branch
          %271 = sbr.rel (%p269) target = $region16
        $region15: #{tpu_custom_call.1} parent=11 // pred_region
          _
        $region16: #{tpu_custom_call.1} parent=11 // pred_fallthru
          _
        // Predicated region
        $region17: #{tpu_custom_call.1} parent=11 // pred_check
          %p272 = pneg %p104
        $region18: #{tpu_custom_call.1} parent=11 // pred_check_branch
          %274 = sbr.rel (%p272) target = $region20
        $region19: #{tpu_custom_call.1} parent=11 // pred_region
          _
        $region20: #{tpu_custom_call.1} parent=11 // pred_fallthru
          _
        // Predicated region
        $region21: #{tpu_custom_call.1} parent=11 // pred_check
          %p275 = pneg %p125
        $region22: #{tpu_custom_call.1} parent=11 // pred_check_branch
          %277 = sbr.rel (%p275) target = $region24
        $region23: #{tpu_custom_call.1} parent=11 // pred_region
          _
        $region24: #{tpu_custom_call.1} parent=11 // pred_fallthru
          _
        // Predicated region
        $region25: #{tpu_custom_call.1} parent=11 // pred_check
          %p278 = pneg %p146
        $region26: #{tpu_custom_call.1} parent=11 // pred_check_branch
          %280 = sbr.rel (%p278) target = $region28
        $region27: #{tpu_custom_call.1} parent=11 // pred_region
          _
        $region28: #{tpu_custom_call.1} parent=11 // pred_fallthru
          _
        // Predicated region
        $region29: #{tpu_custom_call.1} parent=11 // pred_check
          %p281 = pneg %p172
        $region30: #{tpu_custom_call.1} parent=11 // pred_check_branch
          %283 = sbr.rel (%p281) target = $region32
        $region31: #{tpu_custom_call.1} parent=11 // pred_region
          %s284 = smul.u32 8, %s31
          %p285 = scmp.lt.s32.totalorder %s284, 7
          %s286 = scalar_select %p285, %s284, 7
          %s287 = smul.addr %s286, 8
          %s288 = scalar_lea.vmem %s5, %s287
          %s289 = smul.u32 8, %s31
        $region32: #{tpu_custom_call.1} parent=11 // pred_fallthru
          _
        // Predicated region
        $region33: #{tpu_custom_call.1} parent=11 // pred_check
          %p290 = pneg %p198
        $region34: #{tpu_custom_call.1} parent=11 // pred_check_branch
          %292 = sbr.rel (%p290) target = $region36
        $region35: #{tpu_custom_call.1} parent=11 // pred_region
          %s293 = smul.u32 8, %s31
          %s295 = ssub.s32 1024, 1024
          %296 = vsyncadd [#allocation3], %s295
          %s297 = smul.addr %s293, 128
          %s298 = scalar_lea.hbm %s6, %s297
          %s299 = sshll.u32 [#allocation2], 4
          %s300 = int_to_ptr.vmem [resolvable:$true] %s299
          %305 = dma.hbm_to_vmem [thread:$0]  %s298, 1024, %s300, [#allocation3], 128, 128, 8
        $region36: #{tpu_custom_call.1} parent=11 // pred_fallthru
          _
      $region12: #{tpu_custom_call.1} parent=5 // pred_fallthru
        _
      %p306 = scmp.lt.s32.totalorder %s22, 2
      // Predicated region
      $region37: #{tpu_custom_call.1} parent=5 // pred_check
        %p307 = pneg %p306
      $region38: #{tpu_custom_call.1} parent=5 // pred_check_branch
        %309 = sbr.rel (%p307) target = $region40
      $region39: #{tpu_custom_call.1} parent=5 // pred_region
        // Predicated region
        $region41: #{tpu_custom_call.1} parent=39 // pred_check
          %p310 = pneg %p56
        $region42: #{tpu_custom_call.1} parent=39 // pred_check_branch
          %312 = sbr.rel (%p310) target = $region44
        $region43: #{tpu_custom_call.1} parent=39 // pred_region
          %s313 = smul.u32 8, %s29
          %p314 = scmp.lt.s32.totalorder %s30, 1
          %s315 = scalar_select %p314, %s30, 1
          %p316 = scmp.lt.s32.totalorder %s313, 7
          %s317 = scalar_select %p316, %s313, 7
          %s318 = smul.addr %s315, 8
          %s319 = sadd.s32 %s317, %s318
          %s320 = smul.addr %s319, 4
          %s321 = scalar_lea.vmem %s0, %s320
          %s322 = smul.u32 8, %s29
        $region44: #{tpu_custom_call.1} parent=39 // pred_fallthru
          _
      $region40: #{tpu_custom_call.1} parent=5 // pred_fallthru
        _
      %p323 = scmp.le.s32.totalorder 1, %s22
      %p324 = scmp.lt.s32.totalorder %s22, 3
      %p325 = pnand %p323, %p324
      %p326 = pneg %p325
      // Predicated region
      $region45: #{tpu_custom_call.1} parent=5 // pred_check
        _
      $region46: #{tpu_custom_call.1} parent=5 // pred_check_branch
        %328 = sbr.rel (%p325) target = $region48
      $region47: #{tpu_custom_call.1} parent=5 // pred_region
        %s329 = ssub.s32 %s22, 1
        // Predicated region
        $region49: #{tpu_custom_call.1} parent=47 // pred_check
          %p330 = pneg %p198
        $region50: #{tpu_custom_call.1} parent=47 // pred_check_branch
          %332 = sbr.rel (%p330) target = $region52
        $region51: #{tpu_custom_call.1} parent=47 // pred_region
          %333 = dma.done [#allocation3], 1024
        $region52: #{tpu_custom_call.1} parent=47 // pred_fallthru
          _
        %s334 = smul.u32 8, %s31
        %p335 = scmp.lt.s32.totalorder %s32, 1
        %s336 = scalar_select %p335, %s32, 1
        %p337 = scmp.lt.s32.totalorder %s334, 7
        %s338 = scalar_select %p337, %s334, 7
        %s339 = smul.addr %s336, 8
        %s340 = sadd.s32 %s338, %s339
        %s341 = smul.addr %s340, 4
        %s342 = scalar_lea.vmem %s0, %s341
        %p343 = pneg %p62
        %p344 = pneg %p59
        %p345 = pneg %p83
        %p346 = pneg %p80
        %p347 = pneg %p104
        %p348 = pneg %p101
        %p349 = pneg %p125
        %p350 = pneg %p122
        %p351 = pneg %p146
        %p352 = pneg %p143
        %s353 = smul.u32 8, %s31
        %p354 = scmp.lt.s32.totalorder %s353, 7
        %s355 = scalar_select %p354, %s353, 7
        %s356 = smul.addr %s355, 8
        %s357 = scalar_lea.vmem %s5, %s356
        %p358 = pneg %p172
        %p359 = pneg %p169
        %p360 = pneg %p198
        %p361 = pneg %p195
        %p362 = pneg %p226
        %p363 = pneg %p223
        %s364 = sand.u32 %s213, 1
        %s365 = scalar_lea.sflag [#allocation4], %s364
        %s366 = sand.u32 %s213, 1
        %s367 = smul.addr %s366, 32
        %s368 = scalar_lea.vmem [#allocation5], %s367
        %p369 = pneg %p254
        %p370 = pneg %p251
        %s371 = sand.u32 %s241, 1
        %s372 = scalar_lea.sflag [#allocation7], %s371
        %s373 = sand.u32 %s241, 1
        %s374 = smul.addr %s373, 32
        %s375 = scalar_lea.vmem [#allocation6], %s374
        %s376 = smul.u32 8, %s31
        %p377 = scmp.lt.s32.totalorder %s32, 1
        %s378 = scalar_select %p377, %s32, 1
        %p379 = scmp.lt.s32.totalorder %s376, 7
        %s380 = scalar_select %p379, %s376, 7
        %s381 = smul.addr %s378, 8
        %s382 = sadd.s32 %s380, %s381
        %s383 = smul.addr %s382, 4
        %s384 = scalar_lea.vmem %s0, %s383
        %s385 = smul.u32 8, %s31
        %s386 = smul.u32 8, %s31
        %p387 = scmp.lt.s32.totalorder %s386, 7
        %s388 = scalar_select %p387, %s386, 7
        %s389 = smul.addr %s388, 8
        %s390 = scalar_lea.vmem %s5, %s389
        %s391 = smul.u32 8, %s31
        %s392 = smul.u32 8, %s31
        %s393 = smul.u32 8, %s31
        %s394 = smul.u32 8, %s31
        %v396 = vld [vmem:[%s384] sm:$0xf]
        %v397 = vld [vmem:[%s384 + $0x4] sm:$0xf]
        %v398 = vld [vmem:[%s384 + $0x8] sm:$0xf]
        %v399 = vld [vmem:[%s384 + $0xc] sm:$0xf]
        %v400 = vld [vmem:[%s384 + $0x10] sm:$0xf]
        %v401 = vld [vmem:[%s384 + $0x14] sm:$0xf]
        %v402 = vld [vmem:[%s384 + $0x18] sm:$0xf]
        %v403 = vld [vmem:[%s384 + $0x1c] sm:$0xf]
        %v404 = vld [vmem:[%s1] sm:$0xf]
        %v405 = vld [vmem:[%s1 + $0x4] sm:$0xf]
        %v406 = vld [vmem:[%s1 + $0x8] sm:$0xf]
        %v407 = vld [vmem:[%s1 + $0xc] sm:$0xf]
        %v408 = vld [vmem:[%s3] sm:$0x1]
        %v410 = vlaneseq
        %v411 = vshrl.u32 %v410, 7
        %v412 = vsub.s32 0, %v411
        %v413 = vrot.slane %v408, %v412
        %v423 = vunpack.c.l.b16 %v396
        %v424 = vunpack.c.l.b16 %v397
        %v425 = vunpack.c.l.b16 %v398
        %v426 = vunpack.c.l.b16 %v399
        %v427 = vunpack.c.l.b16 %v400
        %v428 = vunpack.c.l.b16 %v401
        %v429 = vunpack.c.l.b16 %v402
        %v430 = vunpack.c.l.b16 %v403
        %v431 = vpack.c.b16 %v424, %v423
        %v432 = vpack.c.b16 %v426, %v425
        %v433 = vpack.c.b16 %v428, %v427
        %v434 = vpack.c.b16 %v430, %v429
        %v439 = vunpack.c.l.b16 %v404
        %v440 = vunpack.c.l.b16 %v405
        %v441 = vunpack.c.l.b16 %v406
        %v442 = vunpack.c.l.b16 %v407
        %v443 = vpack.c.b16 %v440, %v439
        %v444 = vpack.c.b16 %v442, %v441
        %vm447 = vcmask 261120
        %v449 = vsel %vm447, %v431, 0
        %v452 = vsel %vm447, %v432, 0
        %v455 = vsel %vm447, %v433, 0
        %v458 = vsel %vm447, %v434, 0
        %460 = vmatprep.subr.bf16.mxu0 0
        %461 = vmatpush1.bf16.msra.mxu0 %v443
        %462 = vmatprep.subr.bf16.mxu0 0
        %463 = vmatpush1.bf16.msra.mxu0 %v444
        %464 = vmatprep.subr.bf16.mxu0 0
        %465 = vmatpush1.bf16.msra.mxu0 0
        %466 = vmatprep.subr.bf16.mxu0 0
        %467 = vmatpush1.bf16.msra.mxu0 0
        %468 = vmatprep.subr.bf16.mxu0 0
        %469 = vmatpush1.bf16.msra.mxu0 0
        %470 = vmatprep.subr.bf16.mxu0 0
        %471 = vmatpush1.bf16.msra.mxu0 0
        %472 = vmatprep.subr.bf16.mxu0 0
        %473 = vmatpush1.bf16.msra.mxu0 0
        %474 = vmatprep.subr.bf16.mxu0 0
        %475 = vmatpush1.bf16.msra.mxu0 0
        %476 = vmatprep.subr.bf16.mxu0 0
        %477 = vmatpush1.bf16.msra.mxu0 0
        %478 = vmatprep.subr.bf16.mxu0 0
        %479 = vmatpush1.bf16.msra.mxu0 0
        %480 = vmatprep.subr.bf16.mxu0 0
        %481 = vmatpush1.bf16.msra.mxu0 0
        %482 = vmatprep.subr.bf16.mxu0 0
        %483 = vmatpush1.bf16.msra.mxu0 0
        %484 = vmatprep.subr.bf16.mxu0 0
        %485 = vmatpush1.bf16.msra.mxu0 0
        %486 = vmatprep.subr.bf16.mxu0 0
        %487 = vmatpush1.bf16.msra.mxu0 0
        %488 = vmatprep.subr.bf16.mxu0 0
        %489 = vmatpush1.bf16.msra.mxu0 0
        %490 = vmatprep.subr.bf16.mxu0 0
        %491 = vmatpush1.bf16.msra.mxu0 0
        %492 = vmatprep.mubr.bf16.mxu0 0
        %493 = vmatmul.mubr.bf16.gmra.mrb[0].mxu0 %v449
        %v494 = vpop.f32.mrb[0].mxu0
        %v495 = vadd.f32 %v413, %v494
        %v496 = vpop.f32.mrb[0].mxu0
        %v497 = vpop.f32.mrb[0].mxu0
        %v498 = vadd.f32 %v413, %v497
        %v499 = vpop.f32.mrb[0].mxu0
        %500 = vmatprep.mubr.bf16.mxu0 0
        %501 = vmatmul.mubr.bf16.gmra.mrb[0].mxu0 %v452
        %v502 = vpop.f32.mrb[0].mxu0
        %v503 = vadd.f32 %v413, %v502
        %v504 = vpop.f32.mrb[0].mxu0
        %v505 = vpop.f32.mrb[0].mxu0
        %v506 = vadd.f32 %v413, %v505
        %v507 = vpop.f32.mrb[0].mxu0
        %508 = vmatprep.mubr.bf16.mxu0 0
        %509 = vmatmul.mubr.bf16.gmra.mrb[0].mxu0 %v455
        %v510 = vpop.f32.mrb[0].mxu0
        %v511 = vadd.f32 %v413, %v510
        %v512 = vpop.f32.mrb[0].mxu0
        %v513 = vpop.f32.mrb[0].mxu0
        %v514 = vadd.f32 %v413, %v513
        %v515 = vpop.f32.mrb[0].mxu0
        %516 = vmatprep.mubr.bf16.mxu0 0
        %517 = vmatmul.mubr.bf16.gmra.mrb[0].mxu0 %v458
        %v518 = vpop.f32.mrb[0].mxu0
        %v519 = vadd.f32 %v413, %v518
        %v520 = vpop.f32.mrb[0].mxu0
        %v521 = vpop.f32.mrb[0].mxu0
        %v522 = vadd.f32 %v413, %v521
        %v523 = vpop.f32.mrb[0].mxu0
        %524 = vdwg.mxu0
        %v525 = vld [vmem:[%s390] sm:$0xff]
        %v526 = vld [vmem:[%s390 + $0x8] sm:$0xff]
        %v527 = vld [vmem:[%s390 + $0x10] sm:$0xff]
        %v528 = vld [vmem:[%s390 + $0x18] sm:$0xff]
        %v529 = vld [vmem:[%s390 + $0x20] sm:$0xff]
        %v530 = vld [vmem:[%s390 + $0x28] sm:$0xff]
        %v531 = vld [vmem:[%s390 + $0x30] sm:$0xff]
        %v532 = vld [vmem:[%s390 + $0x38] sm:$0xff]
        %v533 = vadd.f32 %v495, %v525
        %v534 = vadd.f32 %v498, %v526
        %v535 = vadd.f32 %v503, %v527
        %v536 = vadd.f32 %v506, %v528
        %v537 = vadd.f32 %v511, %v529
        %v538 = vadd.f32 %v514, %v530
        %v539 = vadd.f32 %v519, %v531
        %v540 = vadd.f32 %v522, %v532
        %v541 = vpack.c.bf16 %v534, %v533
        %v542 = vpack.c.bf16 %v536, %v535
        %v543 = vpack.c.bf16 %v538, %v537
        %v544 = vpack.c.bf16 %v540, %v539
        %v549 = vunpack.c.l.b16 %v541
        %v550 = vunpack.c.h.b16 %v541
        %v551 = vunpack.c.l.b16 %v542
        %v552 = vunpack.c.h.b16 %v542
        %v553 = vunpack.c.l.b16 %v543
        %v554 = vunpack.c.h.b16 %v543
        %v555 = vunpack.c.l.b16 %v544
        %v556 = vunpack.c.h.b16 %v544
        %v557 = vpack.c.b16 %v549, %v549
        %v558 = vpack.c.b16 %v550, %v550
        %v559 = vpack.c.b16 %v551, %v551
        %v560 = vpack.c.b16 %v552, %v552
        %v561 = vpack.c.b16 %v553, %v553
        %v562 = vpack.c.b16 %v554, %v554
        %v563 = vpack.c.b16 %v555, %v555
        %v564 = vpack.c.b16 %v556, %v556
        %573 = vst [vmem:[%s368] sm:$0xf] %v557
        %574 = vst [vmem:[%s368 + $0x4] sm:$0xf] %v558
        %575 = vst [vmem:[%s368 + $0x8] sm:$0xf] %v559
        %576 = vst [vmem:[%s368 + $0xc] sm:$0xf] %v560
        %577 = vst [vmem:[%s368 + $0x10] sm:$0xf] %v561
        %578 = vst [vmem:[%s368 + $0x14] sm:$0xf] %v562
        %579 = vst [vmem:[%s368 + $0x18] sm:$0xf] %v563
        %580 = vst [vmem:[%s368 + $0x1c] sm:$0xf] %v564
        %v581 = vld [vmem:[%s2] sm:$0xf]
        %v582 = vld [vmem:[%s2 + $0x4] sm:$0xf]
        %v583 = vld [vmem:[%s2 + $0x8] sm:$0xf]
        %v584 = vld [vmem:[%s2 + $0xc] sm:$0xf]
        %v585 = vld [vmem:[%s4] sm:$0x1]
        %v587 = vlaneseq
        %v588 = vshrl.u32 %v587, 7
        %v589 = vsub.s32 0, %v588
        %v590 = vrot.slane %v585, %v589
        %v596 = vunpack.c.l.b16 %v581
        %v597 = vunpack.c.l.b16 %v582
        %v598 = vunpack.c.l.b16 %v583
        %v599 = vunpack.c.l.b16 %v584
        %v600 = vpack.c.b16 %v597, %v596
        %v601 = vpack.c.b16 %v599, %v598
        %604 = vmatprep.subr.bf16.mxu0 0
        %605 = vmatpush1.bf16.msra.mxu0 %v600
        %606 = vmatprep.subr.bf16.mxu0 0
        %607 = vmatpush1.bf16.msra.mxu0 %v601
        %608 = vmatprep.subr.bf16.mxu0 0
        %609 = vmatpush1.bf16.msra.mxu0 0
        %610 = vmatprep.subr.bf16.mxu0 0
        %611 = vmatpush1.bf16.msra.mxu0 0
        %612 = vmatprep.subr.bf16.mxu0 0
        %613 = vmatpush1.bf16.msra.mxu0 0
        %614 = vmatprep.subr.bf16.mxu0 0
        %615 = vmatpush1.bf16.msra.mxu0 0
        %616 = vmatprep.subr.bf16.mxu0 0
        %617 = vmatpush1.bf16.msra.mxu0 0
        %618 = vmatprep.subr.bf16.mxu0 0
        %619 = vmatpush1.bf16.msra.mxu0 0
        %620 = vmatprep.subr.bf16.mxu0 0
        %621 = vmatpush1.bf16.msra.mxu0 0
        %622 = vmatprep.subr.bf16.mxu0 0
        %623 = vmatpush1.bf16.msra.mxu0 0
        %624 = vmatprep.subr.bf16.mxu0 0
        %625 = vmatpush1.bf16.msra.mxu0 0
        %626 = vmatprep.subr.bf16.mxu0 0
        %627 = vmatpush1.bf16.msra.mxu0 0
        %628 = vmatprep.subr.bf16.mxu0 0
        %629 = vmatpush1.bf16.msra.mxu0 0
        %630 = vmatprep.subr.bf16.mxu0 0
        %631 = vmatpush1.bf16.msra.mxu0 0
        %632 = vmatprep.subr.bf16.mxu0 0
        %633 = vmatpush1.bf16.msra.mxu0 0
        %634 = vmatprep.subr.bf16.mxu0 0
        %635 = vmatpush1.bf16.msra.mxu0 0
        %636 = vmatprep.mubr.bf16.mxu0 0
        %637 = vmatmul.mubr.bf16.gmra.mrb[0].mxu0 %v449
        %v638 = vpop.f32.mrb[0].mxu0
        %v639 = vadd.f32 %v590, %v638
        %v640 = vpop.f32.mrb[0].mxu0
        %v641 = vpop.f32.mrb[0].mxu0
        %v642 = vadd.f32 %v590, %v641
        %v643 = vpop.f32.mrb[0].mxu0
        %644 = vmatprep.mubr.bf16.mxu0 0
        %645 = vmatmul.mubr.bf16.gmra.mrb[0].mxu0 %v452
        %v646 = vpop.f32.mrb[0].mxu0
        %v647 = vadd.f32 %v590, %v646
        %v648 = vpop.f32.mrb[0].mxu0
        %v649 = vpop.f32.mrb[0].mxu0
        %v650 = vadd.f32 %v590, %v649
        %v651 = vpop.f32.mrb[0].mxu0
        %652 = vmatprep.mubr.bf16.mxu0 0
        %653 = vmatmul.mubr.bf16.gmra.mrb[0].mxu0 %v455
        %v654 = vpop.f32.mrb[0].mxu0
        %v655 = vadd.f32 %v590, %v654
        %v656 = vpop.f32.mrb[0].mxu0
        %v657 = vpop.f32.mrb[0].mxu0
        %v658 = vadd.f32 %v590, %v657
        %v659 = vpop.f32.mrb[0].mxu0
        %660 = vmatprep.mubr.bf16.mxu0 0
        %661 = vmatmul.mubr.bf16.gmra.mrb[0].mxu0 %v458
        %v662 = vpop.f32.mrb[0].mxu0
        %v663 = vadd.f32 %v590, %v662
        %v664 = vpop.f32.mrb[0].mxu0
        %v665 = vpop.f32.mrb[0].mxu0
        %v666 = vadd.f32 %v590, %v665
        %v667 = vpop.f32.mrb[0].mxu0
        %668 = vdwg.mxu0
        %v669 = vld [vmem:[#allocation2] sm:$0xff]
        %v670 = vld [vmem:[#allocation2 + $0x8] sm:$0xff]
        %v671 = vld [vmem:[#allocation2 + $0x10] sm:$0xff]
        %v672 = vld [vmem:[#allocation2 + $0x18] sm:$0xff]
        %v673 = vld [vmem:[#allocation2 + $0x20] sm:$0xff]
        %v674 = vld [vmem:[#allocation2 + $0x28] sm:$0xff]
        %v675 = vld [vmem:[#allocation2 + $0x30] sm:$0xff]
        %v676 = vld [vmem:[#allocation2 + $0x38] sm:$0xff]
        %v677 = vadd.f32 %v639, %v669
        %v678 = vadd.f32 %v642, %v670
        %v679 = vadd.f32 %v647, %v671
        %v680 = vadd.f32 %v650, %v672
        %v681 = vadd.f32 %v655, %v673
        %v682 = vadd.f32 %v658, %v674
        %v683 = vadd.f32 %v663, %v675
        %v684 = vadd.f32 %v666, %v676
        %v685 = vpack.c.bf16 %v678, %v677
        %v686 = vpack.c.bf16 %v680, %v679
        %v687 = vpack.c.bf16 %v682, %v681
        %v688 = vpack.c.bf16 %v684, %v683
        %v693 = vunpack.c.l.b16 %v685
        %v694 = vunpack.c.h.b16 %v685
        %v695 = vunpack.c.l.b16 %v686
        %v696 = vunpack.c.h.b16 %v686
        %v697 = vunpack.c.l.b16 %v687
        %v698 = vunpack.c.h.b16 %v687
        %v699 = vunpack.c.l.b16 %v688
        %v700 = vunpack.c.h.b16 %v688
        %v701 = vpack.c.b16 %v693, %v693
        %v702 = vpack.c.b16 %v694, %v694
        %v703 = vpack.c.b16 %v695, %v695
        %v704 = vpack.c.b16 %v696, %v696
        %v705 = vpack.c.b16 %v697, %v697
        %v706 = vpack.c.b16 %v698, %v698
        %v707 = vpack.c.b16 %v699, %v699
        %v708 = vpack.c.b16 %v700, %v700
        %vm717 = vcmask 519168
        %718 = vst.msk [vmem:[%s375] sm:$0xf] %vm717, %v701
        %719 = vst.msk [vmem:[%s375 + $0x4] sm:$0xf] %vm717, %v702
        %720 = vst.msk [vmem:[%s375 + $0x8] sm:$0xf] %vm717, %v703
        %721 = vst.msk [vmem:[%s375 + $0xc] sm:$0xf] %vm717, %v704
        %722 = vst.msk [vmem:[%s375 + $0x10] sm:$0xf] %vm717, %v705
        %723 = vst.msk [vmem:[%s375 + $0x14] sm:$0xf] %vm717, %v706
        %724 = vst.msk [vmem:[%s375 + $0x18] sm:$0xf] %vm717, %v707
        %725 = vst.msk [vmem:[%s375 + $0x1c] sm:$0xf] %vm717, %v708
        %s726 = sand.u32 %s213, 1
        %s727 = scalar_lea.sflag [#allocation4], %s726
        %s728 = sand.u32 %s213, 1
        %s729 = smul.addr %s728, 32
        %s730 = scalar_lea.vmem [#allocation5], %s729
        %s731 = sand.u32 %s241, 1
        %s732 = scalar_lea.sflag [#allocation7], %s731
        %s733 = sand.u32 %s241, 1
        %s734 = smul.addr %s733, 32
        %s735 = scalar_lea.vmem [#allocation6], %s734
        // Predicated region
        $region53: #{tpu_custom_call.1} parent=47 // pred_check
          %p736 = pneg %p223
        $region54: #{tpu_custom_call.1} parent=47 // pred_check_branch
          %738 = sbr.rel (%p736) target = $region56
        $region55: #{tpu_custom_call.1} parent=47 // pred_region
          %s739 = smul.u32 8, %s31
          %s741 = ssub.s32 512, 512
          %742 = vsyncadd %s727, %s741
          %s743 = smul.addr %s32, 8
          %s744 = sadd.s32 %s739, %s743
          %s745 = smul.addr %s744, 64
          %s746 = scalar_lea.hbm %s7, %s745
          %s747 = sshll.u32 %s730, 4
          %s748 = int_to_ptr.vmem [resolvable:$true] %s747
          %753 = dma.vmem_to_hbm [thread:$0]  %s748, 512, %s746, %s727, 64, 64, 4
        $region56: #{tpu_custom_call.1} parent=47 // pred_fallthru
          _
        // Predicated region
        $region57: #{tpu_custom_call.1} parent=47 // pred_check
          %p754 = pneg %p251
        $region58: #{tpu_custom_call.1} parent=47 // pred_check_branch
          %756 = sbr.rel (%p754) target = $region60
        $region59: #{tpu_custom_call.1} parent=47 // pred_region
          %s757 = smul.u32 8, %s31
          %s759 = ssub.s32 512, 512
          %760 = vsyncadd %s732, %s759
          %s761 = smul.addr %s32, 8
          %s762 = sadd.s32 %s757, %s761
          %s763 = smul.addr %s762, 64
          %s764 = scalar_lea.hbm %s8, %s763
          %s765 = sshll.u32 %s735, 4
          %s766 = int_to_ptr.vmem [resolvable:$true] %s765
          %771 = dma.vmem_to_hbm [thread:$0]  %s766, 512, %s764, %s732, 64, 64, 4
        $region60: #{tpu_custom_call.1} parent=47 // pred_fallthru
          _
      $region48: #{tpu_custom_call.1} parent=5 // pred_fallthru
        _
      %p772 = scmp.le.s32.totalorder 2, %s22
      // Predicated region
      $region61: #{tpu_custom_call.1} parent=5 // pred_check
        %p773 = pneg %p772
      $region62: #{tpu_custom_call.1} parent=5 // pred_check_branch
        %775 = sbr.rel (%p773) target = $region64
      $region63: #{tpu_custom_call.1} parent=5 // pred_region
        %s776 = ssub.s32 %s22, 2
        // Predicated region
        $region65: #{tpu_custom_call.1} parent=63 // pred_check
          %p777 = pneg %p229
        $region66: #{tpu_custom_call.1} parent=63 // pred_check_branch
          %779 = sbr.rel (%p777) target = $region68
        $region67: #{tpu_custom_call.1} parent=63 // pred_region
          %s780 = sand.u32 %s214, 1
          %s781 = scalar_lea.sflag [#allocation4], %s780
          %s782 = sand.u32 %s214, 1
          %s783 = smul.addr %s782, 32
          %s784 = scalar_lea.vmem [#allocation5], %s783
          %785 = dma.done %s781, 512
        $region68: #{tpu_custom_call.1} parent=63 // pred_fallthru
          _
        // Predicated region
        $region69: #{tpu_custom_call.1} parent=63 // pred_check
          %p786 = pneg %p257
        $region70: #{tpu_custom_call.1} parent=63 // pred_check_branch
          %788 = sbr.rel (%p786) target = $region72
        $region71: #{tpu_custom_call.1} parent=63 // pred_region
          %s789 = sand.u32 %s242, 1
          %s790 = scalar_lea.sflag [#allocation7], %s789
          %s791 = sand.u32 %s242, 1
          %s792 = smul.addr %s791, 32
          %s793 = scalar_lea.vmem [#allocation6], %s792
          %794 = dma.done %s790, 512
        $region72: #{tpu_custom_call.1} parent=63 // pred_fallthru
          _
      $region64: #{tpu_custom_call.1} parent=5 // pred_fallthru
        _
    $region6: #{tpu_custom_call.1} parent=1 // loop_footer
      %s26 = sadd.s32 1, %s22
    $region7: #{tpu_custom_call.1} parent=1 // loop_footer_branch
      %21 = sbr.rel target = $region3
    $region8: #{tpu_custom_call.1} parent=1 // loop_exit
      _
    %795 = vsyncpa [#allocation3], 1
    %s796 = scalar_lea.sflag [#allocation3], 1
    %797 = vsyncpa %s796, 1
    %798 = vsyncpa [#allocation4], 1
    %s799 = scalar_lea.sflag [#allocation4], 1
    %800 = vsyncpa %s799, 1
    %801 = vsyncpa [#allocation7], 1
    %s802 = scalar_lea.sflag [#allocation7], 1
    %803 = vsyncpa %s802, 1

</llo_original>
